<compile_context>
chip_gen: v7x
topology: tpu7x:2x2x1
jax: 0.10.0
libtpu: 0.0.40
codegen_flags: <defaults>
</compile_context>

<pallas_src>
import jax
import jax.numpy as jnp
from jax.experimental import pallas as pl
from jax.experimental.pallas import tpu as pltpu

_LANE = 128
_SUBLANE = 8


def _round_up(x, m):
    return ((x + m - 1) // m) * m


def _partials_kernel(z_ref, r_ref, abs_out, ovl_out, cnt_out):
    # Block shapes are static: (tile_rows, Wp) inputs, (8, Wp) outputs.
    th, w = z_ref.shape
    z = z_ref[...]
    r = r_ref[...]

    diff = jnp.abs(z - r)
    b_f = (r > 0.0).astype(jnp.float32)      # maskB as float
    ab_f = jnp.where(z > 0.0, b_f, 0.0)      # (maskA & maskB) as float

    # Fold (tile_rows, W) -> (8, W): adds corresponding vregs (pure VALU work,
    # no cross-lane/XLU reductions inside the pipelined loop).
    def fold(x):
        return x.reshape(th // _SUBLANE, _SUBLANE, w).sum(axis=0)

    abs_out[...] = fold(diff)
    ovl_out[...] = fold(ab_f)
    cnt_out[...] = fold(b_f)


def renderer_forward_loss(zbuf, ref_z, *, tile_rows=None,
                          target_block_bytes=4 << 20):
    """zbuf, ref_z: (1, H, W, 1) f32 depth buffers (PyTorch3D zbuf layout)."""
    z2d = jnp.asarray(zbuf, jnp.float32).reshape(zbuf.shape[1], zbuf.shape[2])
    r2d = jnp.asarray(ref_z, jnp.float32).reshape(ref_z.shape[1], ref_z.shape[2])
    H, W = z2d.shape

    # Pad to (8, 128)-aligned shapes; zero padding contributes nothing to any
    # of the three sums (z = r = 0 -> both masks false, |diff| = 0).
    Wp = _round_up(W, _LANE)
    if tile_rows is None:
        rows = max(_SUBLANE,
                   (target_block_bytes // (Wp * 4)) // _SUBLANE * _SUBLANE)
        tile_rows = min(rows, _round_up(H, _SUBLANE))
    tile_rows = max(_SUBLANE, (tile_rows // _SUBLANE) * _SUBLANE)
    Hp = _round_up(H, tile_rows)
    if (Hp, Wp) != (H, W):
        z2d = jnp.pad(z2d, ((0, Hp - H), (0, Wp - W)))
        r2d = jnp.pad(r2d, ((0, Hp - H), (0, Wp - W)))
    num_tiles = Hp // tile_rows

    # VMEM budget: 2 inputs x 2 pipeline buffers x block, + 3 outputs x 2 x (8, W).
    block_bytes = tile_rows * Wp * 4
    out_bytes = _SUBLANE * Wp * 4
    needed = 2 * 2 * block_bytes + 3 * 2 * out_bytes
    vmem_limit = int(min(max(needed + (4 << 20), 16 << 20), 48 << 20))

    part_shape = jax.ShapeDtypeStruct((num_tiles, _SUBLANE, Wp), jnp.float32)
    in_spec = pl.BlockSpec((tile_rows, Wp), lambda i: (i, 0))
    out_spec = pl.BlockSpec((None, _SUBLANE, Wp), lambda i: (i, 0, 0))

    abs_p, ovl_p, cnt_p = pl.pallas_call(
        _partials_kernel,
        out_shape=(part_shape, part_shape, part_shape),
        grid_spec=pltpu.PrefetchScalarGridSpec(
            num_scalar_prefetch=0,
            grid=(num_tiles,),
            in_specs=[in_spec, in_spec],
            out_specs=(out_spec, out_spec, out_spec),
        ),
        compiler_params=pltpu.CompilerParams(
            dimension_semantics=("parallel",),
            vmem_limit_bytes=vmem_limit,
        ),
    )(z2d, r2d)

    # Tiny final reductions + loss formula (run once, outside the hot loop).
    abs_total = abs_p.sum()
    ovl_total = ovl_p.sum()
    cnt_total = cnt_p.sum()
    # NOTE: like the PyTorch reference, no guard against cnt_total == 0.
    return 1000.0 * (ovl_total / cnt_total) + abs_total


def _make_fake_zbuf(key, H, W):
    """Synthetic depth buffer: positive depths inside a blob, -1 elsewhere
    (matches PyTorch3D zbuf convention where background pixels are -1)."""
    k1, k2 = jax.random.split(key)
    depth = 2.0 + 0.2 * jax.random.normal(k1, (1, H, W, 1), dtype=jnp.float32)
    ys = jnp.arange(H, dtype=jnp.float32)[None, :, None, None]
    xs = jnp.arange(W, dtype=jnp.float32)[None, None, :, None]
    cy = H / 2.0 + 4.0 * jax.random.normal(k2, ())
    cx = W / 2.0
    inside = ((ys - cy) ** 2 / (0.15 * H) ** 2 + (xs - cx) ** 2 / (0.2 * W) ** 2) < 1.0
    return jnp.where(inside, depth, jnp.float32(-1.0))


if __name__ == "__main__":
    # small image_size consistent with the module's (H, W) depth buffers
    H, W = 64, 128
    key = jax.random.PRNGKey(0)
    k_ref, k_cur = jax.random.split(key)

    # TODO(synk): PyTorch3D mesh rasterization (render_tensor) has no Pallas
    # equivalent; depth buffers are synthesized deterministically instead.
    ref_z = _make_fake_zbuf(k_ref, H, W)   # self.ref_z_tensor
    zbuf = _make_fake_zbuf(k_cur, H, W)    # rasterizer output at current pose

    loss = renderer_forward_loss(zbuf, ref_z)
    jax.block_until_ready(loss)

    # pure-JAX reference check of the forward() semantics
    mask_a = zbuf > 0
    mask_b = ref_z > 0
    ref_loss = 1000.0 * (mask_a & mask_b).sum() / mask_b.sum() + jnp.abs(
        zbuf - ref_z
    ).sum()
    assert jnp.allclose(loss, ref_loss, rtol=1e-5, atol=1e-4), (loss, ref_loss)

    print("KERNEL_OK")
</pallas_src>

<mosaic_0001>
module attributes {stable_mosaic.version = 11 : i64} {
  func.func @_partials_kernel(%arg0: i32, %arg1: memref<64x128xf32, #tpu.memory_space<vmem>>, %arg2: memref<64x128xf32, #tpu.memory_space<vmem>>, %arg3: memref<1x8x128xf32, #tpu.memory_space<vmem>>, %arg4: memref<1x8x128xf32, #tpu.memory_space<vmem>>, %arg5: memref<1x8x128xf32, #tpu.memory_space<vmem>>) attributes {dimension_semantics = [#tpu.dimension_semantics<parallel>], iteration_bounds = array<i64: 1>, scalar_prefetch = 0 : i64, scratch_operands = 0 : i64, tpu.core_type = #tpu.core_type<tc>, window_params = [{transform_indices = @transform_0, window_bounds = array<i64: 64, 128>}, {transform_indices = @transform_1, window_bounds = array<i64: 64, 128>}, {transform_indices = @transform_2, window_bounds = array<i64: 1, 8, 128>}, {transform_indices = @transform_3, window_bounds = array<i64: 1, 8, 128>}, {transform_indices = @transform_4, window_bounds = array<i64: 1, 8, 128>}]} {
    %c0 = arith.constant 0 : index
    %c0_0 = arith.constant 0 : index
    %0 = vector.load %arg1[%c0, %c0_0] : memref<64x128xf32, #tpu.memory_space<vmem>>, vector<64x128xf32>
    %c0_1 = arith.constant 0 : index
    %c0_2 = arith.constant 0 : index
    %1 = vector.load %arg2[%c0_1, %c0_2] : memref<64x128xf32, #tpu.memory_space<vmem>>, vector<64x128xf32>
    %2 = arith.subf %0, %1 : vector<64x128xf32>
    %3 = math.absf %2 : vector<64x128xf32>
    %cst = arith.constant 0.000000e+00 : f32
    %4 = vector.broadcast %cst : f32 to vector<64x128xf32>
    %5 = arith.cmpf ogt, %1, %4 : vector<64x128xf32>
    %6 = arith.extui %5 : vector<64x128xi1> to vector<64x128xi32>
    %7 = arith.sitofp %6 : vector<64x128xi32> to vector<64x128xf32>
    %cst_3 = arith.constant 0.000000e+00 : f32
    %8 = vector.broadcast %cst_3 : f32 to vector<64x128xf32>
    %9 = arith.cmpf ogt, %0, %8 : vector<64x128xf32>
    %cst_4 = arith.constant 0.000000e+00 : f32
    %10 = vector.broadcast %cst_4 : f32 to vector<64x128xf32>
    %11 = arith.select %9, %7, %10 : vector<64x128xi1>, vector<64x128xf32>
    %12 = vector.shape_cast %3 : vector<64x128xf32> to vector<8x8x128xf32>
    %cst_5 = arith.constant dense<0.000000e+00> : vector<8x128xf32>
    %13 = vector.multi_reduction <add>, %12, %cst_5 [0] : vector<8x8x128xf32> to vector<8x128xf32>
    %c0_6 = arith.constant 0 : index
    %c0_7 = arith.constant 0 : index
    %c0_8 = arith.constant 0 : index
    %14 = vector.load %arg3[%c0_6, %c0_7, %c0_8] : memref<1x8x128xf32, #tpu.memory_space<vmem>>, vector<1x8x128xf32>
    %15 = vector.shape_cast %14 : vector<1x8x128xf32> to vector<8x128xf32>
    %16 = vector.shape_cast %13 : vector<8x128xf32> to vector<1x8x128xf32>
    tpu.vector_store %arg3[%c0_6, %c0_7, %c0_8], %16 {strides = array<i32>} : memref<1x8x128xf32, #tpu.memory_space<vmem>>, vector<1x8x128xf32>,
    %17 = vector.shape_cast %11 : vector<64x128xf32> to vector<8x8x128xf32>
    %cst_9 = arith.constant dense<0.000000e+00> : vector<8x128xf32>
    %18 = vector.multi_reduction <add>, %17, %cst_9 [0] : vector<8x8x128xf32> to vector<8x128xf32>
    %c0_10 = arith.constant 0 : index
    %c0_11 = arith.constant 0 : index
    %c0_12 = arith.constant 0 : index
    %19 = vector.load %arg4[%c0_10, %c0_11, %c0_12] : memref<1x8x128xf32, #tpu.memory_space<vmem>>, vector<1x8x128xf32>
    %20 = vector.shape_cast %19 : vector<1x8x128xf32> to vector<8x128xf32>
    %21 = vector.shape_cast %18 : vector<8x128xf32> to vector<1x8x128xf32>
    tpu.vector_store %arg4[%c0_10, %c0_11, %c0_12], %21 {strides = array<i32>} : memref<1x8x128xf32, #tpu.memory_space<vmem>>, vector<1x8x128xf32>,
    %22 = vector.shape_cast %7 : vector<64x128xf32> to vector<8x8x128xf32>
    %cst_13 = arith.constant dense<0.000000e+00> : vector<8x128xf32>
    %23 = vector.multi_reduction <add>, %22, %cst_13 [0] : vector<8x8x128xf32> to vector<8x128xf32>
    %c0_14 = arith.constant 0 : index
    %c0_15 = arith.constant 0 : index
    %c0_16 = arith.constant 0 : index
    %24 = vector.load %arg5[%c0_14, %c0_15, %c0_16] : memref<1x8x128xf32, #tpu.memory_space<vmem>>, vector<1x8x128xf32>
    %25 = vector.shape_cast %24 : vector<1x8x128xf32> to vector<8x128xf32>
    %26 = vector.shape_cast %23 : vector<8x128xf32> to vector<1x8x128xf32>
    tpu.vector_store %arg5[%c0_14, %c0_15, %c0_16], %26 {strides = array<i32>} : memref<1x8x128xf32, #tpu.memory_space<vmem>>, vector<1x8x128xf32>,
    return
  }
  func.func @transform_0(%arg0: i32) -> (i32, i32) {
    %c0_i32 = arith.constant 0 : i32
    %c0_i32_0 = arith.constant 0 : i32
    return %arg0, %c0_i32 : i32, i32
  }
  func.func @transform_1(%arg0: i32) -> (i32, i32) {
    %c0_i32 = arith.constant 0 : i32
    %c0_i32_0 = arith.constant 0 : i32
    return %arg0, %c0_i32 : i32, i32
  }
  func.func @transform_2(%arg0: i32) -> (i32, i32, i32) {
    %c0_i32 = arith.constant 0 : i32
    %c0_i32_0 = arith.constant 0 : i32
    %c0_i32_1 = arith.constant 0 : i32
    return %arg0, %c0_i32, %c0_i32_0 : i32, i32, i32
  }
  func.func @transform_3(%arg0: i32) -> (i32, i32, i32) {
    %c0_i32 = arith.constant 0 : i32
    %c0_i32_0 = arith.constant 0 : i32
    %c0_i32_1 = arith.constant 0 : i32
    return %arg0, %c0_i32, %c0_i32_0 : i32, i32, i32
  }
  func.func @transform_4(%arg0: i32) -> (i32, i32, i32) {
    %c0_i32 = arith.constant 0 : i32
    %c0_i32_0 = arith.constant 0 : i32
    %c0_i32_1 = arith.constant 0 : i32
    return %arg0, %c0_i32, %c0_i32_0 : i32, i32, i32
  }
}

</mosaic_0001>

<llo_original>
// kernel: tpu_custom_call.1
$region0: #{tpu_custom_call.1}
  #allocation0 [shape = 'u32[]', space=smem, size = 0x4, offset = 0x4, fixed_abs, tag = 'smem constant byte address 0x4 - core index']
  #allocation1 [shape = 'u32[144,128]{1,0:T(1,128)}', space=vmem, size = 0x12000, scoped, tag = 'internal scratch']
  %s0 = inlined_call_operand.hbm [shape: f32[64,128], index: 0, kind: input, shape index: {}]
  %s1 = inlined_call_operand.hbm [shape: f32[64,128], index: 1, kind: input, shape index: {}]
  %s2 = inlined_call_operand.hbm [shape: f32[1,8,128], index: 2, kind: output, shape index: {0}]
  %s3 = inlined_call_operand.hbm [shape: f32[1,8,128], index: 3, kind: output, shape index: {1}]
  %s4 = inlined_call_operand.hbm [shape: f32[1,8,128], index: 4, kind: output, shape index: {2}]
  %5 = xla_tuple %s2, %s3, %s4
  %s6 = sld [smem:[#allocation0]]
  $region42: #{tpu_custom_call.1} parent=0
    _
  %s8 = ssub.s32 1, %s6
  %s9 = scalar_select 0, %s8, %s6
  $region1: #{tpu_custom_call.1} parent=0
    #allocation2 [shape = 'u8[32768]{0}', space=vmem, size = 0x8000, scoped, tag = 'input window, operand 0, single buffered']
    #allocation3 [shape = 's32[1]{0}', space=sflag, size = 0x4, scoped, tag = 'scoped memory for tpu_custom_call.1']
    #allocation4 [shape = 's32[1]{0}', space=sflag, size = 0x4, scoped, tag = 'scoped memory for tpu_custom_call.1']
    #allocation5 [shape = 'u8[32768]{0}', space=vmem, size = 0x8000, scoped, tag = 'input window, operand 1, single buffered']
    #allocation6 [shape = 's32[1]{0}', space=sflag, size = 0x4, scoped, tag = 'scoped memory for tpu_custom_call.1']
    #allocation7 [shape = 'u8[4096]{0}', space=vmem, size = 0x1000, scoped, tag = 'output window, operand 0, single buffered']
    #allocation8 [shape = 'u8[4096]{0}', space=vmem, size = 0x1000, scoped, tag = 'output window, operand 1, single buffered']
    #allocation9 [shape = 's32[1]{0}', space=sflag, size = 0x4, scoped, tag = 'scoped memory for tpu_custom_call.1']
    #allocation10 [shape = 'u8[4096]{0}', space=vmem, size = 0x1000, scoped, tag = 'output window, operand 2, single buffered']
    %10 = vsyncpa [#allocation3], 0
    %11 = vsyncpa [#allocation6], 0
    %12 = vsyncpa [#allocation4], 0
    %13 = vsyncpa [#allocation9], 0
    // Predicated region
    $region2: #{tpu_custom_call.1} parent=1 // pred_check
      _
    $region3: #{tpu_custom_call.1} parent=1 // pred_check_branch
      %15 = sbr.rel (0) target = $region5
    $region4: #{tpu_custom_call.1} parent=1 // pred_region
      %s17 = ssub.s32 1024, 1024
      %18 = vsyncadd [#allocation3], %s17
      %s19 = sshll.u32 [#allocation2], 4
      %s20 = int_to_ptr.vmem [resolvable:$true] %s19
      %25 = dma.hbm_to_vmem [thread:$0]  %s0, 1024, %s20, [#allocation3], 128, 128, 8
    $region5: #{tpu_custom_call.1} parent=1 // pred_fallthru
      _
    // Predicated region
    $region6: #{tpu_custom_call.1} parent=1 // pred_check
      _
    $region7: #{tpu_custom_call.1} parent=1 // pred_check_branch
      %27 = sbr.rel (0) target = $region9
    $region8: #{tpu_custom_call.1} parent=1 // pred_region
      %s29 = ssub.s32 1024, 1024
      %30 = vsyncadd [#allocation6], %s29
      %s31 = sshll.u32 [#allocation5], 4
      %s32 = int_to_ptr.vmem [resolvable:$true] %s31
      %37 = dma.hbm_to_vmem [thread:$0]  %s1, 1024, %s32, [#allocation6], 128, 128, 8
    $region9: #{tpu_custom_call.1} parent=1 // pred_fallthru
      _
    // Predicated region
    $region10: #{tpu_custom_call.1} parent=1 // pred_check
      _
    $region11: #{tpu_custom_call.1} parent=1 // pred_check_branch
      %39 = sbr.rel (0) target = $region13
    $region12: #{tpu_custom_call.1} parent=1 // pred_region
      %40 = dma.done [#allocation3], 1024
    $region13: #{tpu_custom_call.1} parent=1 // pred_fallthru
      _
    // Predicated region
    $region14: #{tpu_custom_call.1} parent=1 // pred_check
      _
    $region15: #{tpu_custom_call.1} parent=1 // pred_check_branch
      %42 = sbr.rel (0) target = $region17
    $region16: #{tpu_custom_call.1} parent=1 // pred_region
      %43 = dma.done [#allocation6], 1024
    $region17: #{tpu_custom_call.1} parent=1 // pred_fallthru
      _
    %v44 = vld [vmem:[#allocation2] sm:$0xff]
    %v45 = vld [vmem:[#allocation2 + $0x8] sm:$0xff]
    %v46 = vld [vmem:[#allocation2 + $0x10] sm:$0xff]
    %v47 = vld [vmem:[#allocation2 + $0x18] sm:$0xff]
    %v48 = vld [vmem:[#allocation2 + $0x20] sm:$0xff]
    %v49 = vld [vmem:[#allocation2 + $0x28] sm:$0xff]
    %v50 = vld [vmem:[#allocation2 + $0x30] sm:$0xff]
    %v51 = vld [vmem:[#allocation2 + $0x38] sm:$0xff]
    %v52 = vld [vmem:[#allocation5] sm:$0xff]
    %v53 = vld [vmem:[#allocation5 + $0x8] sm:$0xff]
    %v54 = vld [vmem:[#allocation5 + $0x10] sm:$0xff]
    %v55 = vld [vmem:[#allocation5 + $0x18] sm:$0xff]
    %v56 = vld [vmem:[#allocation5 + $0x20] sm:$0xff]
    %v57 = vld [vmem:[#allocation5 + $0x28] sm:$0xff]
    %v58 = vld [vmem:[#allocation5 + $0x30] sm:$0xff]
    %v59 = vld [vmem:[#allocation5 + $0x38] sm:$0xff]
    %v60 = vsub.f32 %v44, %v52
    %v61 = vsub.f32 %v45, %v53
    %v62 = vsub.f32 %v46, %v54
    %v63 = vsub.f32 %v47, %v55
    %v64 = vsub.f32 %v48, %v56
    %v65 = vsub.f32 %v49, %v57
    %v66 = vsub.f32 %v50, %v58
    %v67 = vsub.f32 %v51, %v59
    %v68 = vand.u32 2147483647, %v60
    %v69 = vand.u32 2147483647, %v61
    %v70 = vand.u32 2147483647, %v62
    %v71 = vand.u32 2147483647, %v63
    %v72 = vand.u32 2147483647, %v64
    %v73 = vand.u32 2147483647, %v65
    %v74 = vand.u32 2147483647, %v66
    %v75 = vand.u32 2147483647, %v67
    %vm76 = vcmp.gt.f32.partialorder %v52, 0.0
    %vm77 = vcmp.gt.f32.partialorder %v53, 0.0
    %vm78 = vcmp.gt.f32.partialorder %v54, 0.0
    %vm79 = vcmp.gt.f32.partialorder %v55, 0.0
    %vm80 = vcmp.gt.f32.partialorder %v56, 0.0
    %vm81 = vcmp.gt.f32.partialorder %v57, 0.0
    %vm82 = vcmp.gt.f32.partialorder %v58, 0.0
    %vm83 = vcmp.gt.f32.partialorder %v59, 0.0
    %v84 = vsel %vm76, 1, 0
    %v85 = vsel %vm77, 1, 0
    %v86 = vsel %vm78, 1, 0
    %v87 = vsel %vm79, 1, 0
    %v88 = vsel %vm80, 1, 0
    %v89 = vsel %vm81, 1, 0
    %v90 = vsel %vm82, 1, 0
    %v91 = vsel %vm83, 1, 0
    %v92 = vcvt.s32.f32 %v84
    %v93 = vcvt.s32.f32 %v85
    %v94 = vcvt.s32.f32 %v86
    %v95 = vcvt.s32.f32 %v87
    %v96 = vcvt.s32.f32 %v88
    %v97 = vcvt.s32.f32 %v89
    %v98 = vcvt.s32.f32 %v90
    %v99 = vcvt.s32.f32 %v91
    %vm100 = vcmp.gt.f32.partialorder %v44, 0.0
    %vm101 = vcmp.gt.f32.partialorder %v45, 0.0
    %vm102 = vcmp.gt.f32.partialorder %v46, 0.0
    %vm103 = vcmp.gt.f32.partialorder %v47, 0.0
    %vm104 = vcmp.gt.f32.partialorder %v48, 0.0
    %vm105 = vcmp.gt.f32.partialorder %v49, 0.0
    %vm106 = vcmp.gt.f32.partialorder %v50, 0.0
    %vm107 = vcmp.gt.f32.partialorder %v51, 0.0
    %v108 = vsel %vm100, %v92, 0.0
    %v109 = vsel %vm101, %v93, 0.0
    %v110 = vsel %vm102, %v94, 0.0
    %v111 = vsel %vm103, %v95, 0.0
    %v112 = vsel %vm104, %v96, 0.0
    %v113 = vsel %vm105, %v97, 0.0
    %v114 = vsel %vm106, %v98, 0.0
    %v115 = vsel %vm107, %v99, 0.0
    %v116 = vadd.f32 %v68, %v69
    %v117 = vadd.f32 %v116, %v70
    %v118 = vadd.f32 %v117, %v71
    %v119 = vadd.f32 %v118, %v72
    %v120 = vadd.f32 %v119, %v73
    %v121 = vadd.f32 %v120, %v74
    %v122 = vadd.f32 %v121, %v75
    %123 = vst [vmem:[#allocation7] sm:$0xff] %v122
    %v124 = vadd.f32 %v108, %v109
    %v125 = vadd.f32 %v124, %v110
    %v126 = vadd.f32 %v125, %v111
    %v127 = vadd.f32 %v126, %v112
    %v128 = vadd.f32 %v127, %v113
    %v129 = vadd.f32 %v128, %v114
    %v130 = vadd.f32 %v129, %v115
    %131 = vst [vmem:[#allocation8] sm:$0xff] %v130
    %v132 = vadd.f32 %v92, %v93
    %v133 = vadd.f32 %v132, %v94
    %v134 = vadd.f32 %v133, %v95
    %v135 = vadd.f32 %v134, %v96
    %v136 = vadd.f32 %v135, %v97
    %v137 = vadd.f32 %v136, %v98
    %v138 = vadd.f32 %v137, %v99
    %139 = vst [vmem:[#allocation10] sm:$0xff] %v138
    // Predicated region
    $region18: #{tpu_custom_call.1} parent=1 // pred_check
      _
    $region19: #{tpu_custom_call.1} parent=1 // pred_check_branch
      %141 = sbr.rel (0) target = $region21
    $region20: #{tpu_custom_call.1} parent=1 // pred_region
      %s143 = ssub.s32 128, 128
      %144 = vsyncadd [#allocation4], %s143
      %s146 = sshll.u32 [#allocation7], 4
      %s147 = int_to_ptr.vmem [resolvable:$true] %s146
      %149 = dma.vmem_to_hbm [thread:$0]  %s147, 128, %s2, [#allocation4]
    $region21: #{tpu_custom_call.1} parent=1 // pred_fallthru
      _
    // Predicated region
    $region22: #{tpu_custom_call.1} parent=1 // pred_check
      _
    $region23: #{tpu_custom_call.1} parent=1 // pred_check_branch
      %151 = sbr.rel (0) target = $region25
    $region24: #{tpu_custom_call.1} parent=1 // pred_region
      %s153 = ssub.s32 128, 128
      %154 = vsyncadd [#allocation9], %s153
      %s156 = sshll.u32 [#allocation8], 4
      %s157 = int_to_ptr.vmem [resolvable:$true] %s156
      %159 = dma.vmem_to_hbm [thread:$0]  %s157, 128, %s3, [#allocation9]
    $region25: #{tpu_custom_call.1} parent=1 // pred_fallthru
      _
    // Predicated region
    $region26: #{tpu_custom_call.1} parent=1 // pred_check
      _
    $region27: #{tpu_custom_call.1} parent=1 // pred_check_branch
      %161 = sbr.rel (0) target = $region29
    $region28: #{tpu_custom_call.1} parent=1 // pred_region
      %s163 = ssub.s32 128, 128
      %164 = vsyncadd [#allocation9], %s163
      %s166 = sshll.u32 [#allocation10], 4
      %s167 = int_to_ptr.vmem [resolvable:$true] %s166
      %169 = dma.vmem_to_hbm [thread:$0]  %s167, 128, %s4, [#allocation9]
    $region29: #{tpu_custom_call.1} parent=1 // pred_fallthru
      _
    // Predicated region
    $region30: #{tpu_custom_call.1} parent=1 // pred_check
      _
    $region31: #{tpu_custom_call.1} parent=1 // pred_check_branch
      %171 = sbr.rel (0) target = $region33
    $region32: #{tpu_custom_call.1} parent=1 // pred_region
      %172 = dma.done [#allocation4], 128
    $region33: #{tpu_custom_call.1} parent=1 // pred_fallthru
      _
    // Predicated region
    $region34: #{tpu_custom_call.1} parent=1 // pred_check
      _
    $region35: #{tpu_custom_call.1} parent=1 // pred_check_branch
      %174 = sbr.rel (0) target = $region37
    $region36: #{tpu_custom_call.1} parent=1 // pred_region
      %175 = dma.done [#allocation9], 128
    $region37: #{tpu_custom_call.1} parent=1 // pred_fallthru
      _
    // Predicated region
    $region38: #{tpu_custom_call.1} parent=1 // pred_check
      _
    $region39: #{tpu_custom_call.1} parent=1 // pred_check_branch
      %177 = sbr.rel (0) target = $region41
    $region40: #{tpu_custom_call.1} parent=1 // pred_region
      %178 = dma.done [#allocation9], 128
    $region41: #{tpu_custom_call.1} parent=1 // pred_fallthru
      _
    %179 = vsyncpa [#allocation3], 1
    %180 = vsyncpa [#allocation6], 1
    %181 = vsyncpa [#allocation4], 1
    %182 = vsyncpa [#allocation9], 1

</llo_original>
